<compile_context>
chip_gen: v7x
topology: tpu7x:2x2x1
jax: 0.10.0
libtpu: 0.0.40
codegen_flags: <defaults>
</compile_context>

<pallas_src>
import jax
import jax.numpy as jnp
from jax.experimental import pallas as pl
from jax.experimental.pallas import tpu as pltpu


def mask_attention_kernel(x_ref, w_ref, m_ref, out_ref, sc_ref):
    # x_ref:  (TB, S, D)  block of batch elements
    # w_ref:  (1, D)      attention projection weight (row layout)
    # m_ref:  (TB, 1, S)  mask, lane-dense (nonzero = keep, 0 = -inf fill)
    # out_ref:(TB, 1, D)  attended outputs
    # sc_ref: (TB, 1, S)  softmax scores, lane-dense
    x = x_ref[...]                                   # (TB, S, D)
    w = w_ref[...]                                   # (1, D)

    # logits[b, s] = sum_d x[b, s, d] * w[d]
    # VPU broadcast-multiply + cross-lane reduce over D (D is small; an MXU
    # matvec with N=1 would use <1% of the systolic array).  Result keeps S on
    # the lane axis so everything downstream stays lane-dense.
    logits = jnp.sum((x * w).astype(jnp.float32), axis=-1)[:, None, :]   # (TB, 1, S)
    # NOTE: the Linear(D, 1) bias is a per-row constant shift, which cancels in
    # softmax; both outputs of the module are bias-invariant, so it is dropped.

    # masked_fill(mask == 0, -inf).  An all-zero mask row yields NaNs, exactly
    # like torch's masked_fill + softmax.
    m = m_ref[...]                                   # (TB, 1, S)
    logits = jnp.where(m == 0, -jnp.inf, logits)

    # softmax over the sequence (lane) axis — exact normalization so that the
    # scores sum to 1 to float rounding.
    s_max = jnp.max(logits, axis=-1, keepdims=True)  # (TB, 1, 1)
    p = jnp.exp(logits - s_max)                      # (TB, 1, S)
    denom = jnp.sum(p, axis=-1, keepdims=True)       # (TB, 1, 1)
    p = p / denom                                    # exact division

    # outputs = scores @ inputs on the MXU: (TB,1,S) x (TB,S,D) -> (TB,1,D)
    out = jnp.einsum('bqs,bsd->bqd', p.astype(x.dtype), x,
                     preferred_element_type=jnp.float32)

    out_ref[...] = out.astype(out_ref.dtype)
    sc_ref[...] = p.astype(sc_ref.dtype)


def _pick_tb(B, S, D, itemsize, target_tile_bytes=1 << 20):
    """Largest divisor of B whose (TB, S, D) x-tile stays under ~1 MiB per buffer
    (Pallas double-buffers, so ~2 MiB live per input stream).  Keeps the batch
    grid axis available for 'parallel' megacore sharding when B is large, and
    stays far below v7x's 64 MiB physical / v5e's 16 MiB default scoped VMEM."""
    per_b = max(1, S * D * itemsize)
    best = 1
    for tb in range(1, B + 1):
        if B % tb == 0 and tb * per_b <= target_tile_bytes:
            best = tb
    return best


def mask_attention(x, w, b, mask=None):
    """x: (B, S, D); w: (1, D) torch Linear weight; b: (1,) bias; mask: (B, S) or None.

    Returns (outputs (B, D), scores (B, 1, S)) — same as the PyTorch module.
    `b` is accepted for API parity but never reaches the kernel: a scalar shift
    of the logits cancels in softmax, so it affects neither returned tensor."""
    B, S, D = x.shape
    if mask is None:
        mask = jnp.ones((B, S), dtype=x.dtype)
    mask_row = mask.astype(x.dtype).reshape(B, 1, S)       # lane-dense (S last)
    w_row = w.reshape(1, D).astype(x.dtype)

    TB = _pick_tb(B, S, D, jnp.dtype(x.dtype).itemsize)
    grid = (B // TB,)

    out, scores = pl.pallas_call(
        mask_attention_kernel,
        out_shape=(
            jax.ShapeDtypeStruct((B, 1, D), x.dtype),
            jax.ShapeDtypeStruct((B, 1, S), x.dtype),
        ),
        grid_spec=pltpu.PrefetchScalarGridSpec(
            num_scalar_prefetch=0,
            grid=grid,
            in_specs=[
                pl.BlockSpec((TB, S, D), lambda i: (i, 0, 0)),
                pl.BlockSpec((1, D), lambda i: (0, 0)),
                pl.BlockSpec((TB, 1, S), lambda i: (i, 0, 0)),
            ],
            out_specs=[
                pl.BlockSpec((TB, 1, D), lambda i: (i, 0, 0)),
                pl.BlockSpec((TB, 1, S), lambda i: (i, 0, 0)),
            ],
        ),
        compiler_params=pltpu.CompilerParams(
            dimension_semantics=("parallel",),       # batch blocks shard across TCs
            vmem_limit_bytes=48 * 1024 * 1024,       # headroom under v7x's 64 MiB
        ),
    )(x, w_row, mask_row)

    outputs = out.reshape(B, D)                      # squeeze the q=1 axis (view)
    return outputs, scores                           # scores already (B, 1, S)


def mask_attention_ref(x, w, b, mask=None):
    # Pure-JAX reference mirroring the PyTorch forward (bias included).
    scores = jnp.einsum('bsd,od->bs', x, w) + b[0]        # (B, S)
    if mask is not None:
        scores = jnp.where(mask == 0, -jnp.inf, scores)
    scores = jax.nn.softmax(scores, axis=-1)[:, None, :]  # (B, 1, S)
    outputs = jnp.matmul(scores, x)[:, 0, :]              # (B, D)
    return outputs, scores


if __name__ == "__main__":
    B, S, D = 4, 8, 32
    key = jax.random.PRNGKey(0)
    kx, kw, kb, km = jax.random.split(key, 4)

    x = jax.random.normal(kx, (B, S, D), dtype=jnp.float32)
    # torch-layout Linear(D, 1) parameters: weight (1, D), bias (1,).
    w = jax.random.normal(kw, (1, D), dtype=jnp.float32) * 0.1
    b = jax.random.normal(kb, (1,), dtype=jnp.float32) * 0.1
    # Mask with some zeros; guarantee at least one valid position per row.
    mask = (jax.random.uniform(km, (B, S)) > 0.3).astype(jnp.float32)
    mask = mask.at[:, 0].set(1.0)

    outputs, scores = mask_attention(x, w, b, mask)
    jax.block_until_ready((outputs, scores))

    ref_out, ref_scores = mask_attention_ref(x, w, b, mask)
    assert outputs.shape == (B, D) and scores.shape == (B, 1, S)
    assert jnp.allclose(outputs, ref_out, atol=1e-4, rtol=1e-4)
    assert jnp.allclose(scores, ref_scores, atol=1e-4, rtol=1e-4)
    # Scores sum to 1 over the sequence axis (exact normalization in-kernel).
    assert jnp.allclose(jnp.sum(scores, axis=-1), 1.0, atol=1e-4)

    # Also exercise the mask=None path (matches torch when mask is None).
    out2, sc2 = mask_attention(x, w, b, None)
    jax.block_until_ready((out2, sc2))
    ref_out2, ref_sc2 = mask_attention_ref(x, w, b, None)
    assert jnp.allclose(out2, ref_out2, atol=1e-4, rtol=1e-4)
    assert jnp.allclose(sc2, ref_sc2, atol=1e-4, rtol=1e-4)

    print("KERNEL_OK")
</pallas_src>

<mosaic_0001>
module attributes {stable_mosaic.version = 11 : i64} {
  func.func @mask_attention_kernel(%arg0: i32, %arg1: memref<4x8x32xf32, #tpu.memory_space<vmem>>, %arg2: memref<1x32xf32, #tpu.memory_space<vmem>>, %arg3: memref<4x1x8xf32, #tpu.memory_space<vmem>>, %arg4: memref<4x1x32xf32, #tpu.memory_space<vmem>>, %arg5: memref<4x1x8xf32, #tpu.memory_space<vmem>>) attributes {dimension_semantics = [#tpu.dimension_semantics<parallel>], iteration_bounds = array<i64: 1>, scalar_prefetch = 0 : i64, scratch_operands = 0 : i64, tpu.core_type = #tpu.core_type<tc>, window_params = [{transform_indices = @transform_0, window_bounds = array<i64: 4, 8, 32>}, {pipeline_mode = #tpu.pipeline_mode<synchronous>, transform_indices = @transform_1, window_bounds = array<i64: 1, 32>}, {transform_indices = @transform_2, window_bounds = array<i64: 4, 1, 8>}, {transform_indices = @transform_3, window_bounds = array<i64: 4, 1, 32>}, {transform_indices = @transform_4, window_bounds = array<i64: 4, 1, 8>}]} {
    %c0 = arith.constant 0 : index
    %c0_0 = arith.constant 0 : index
    %c0_1 = arith.constant 0 : index
    %0 = vector.load %arg1[%c0, %c0_0, %c0_1] : memref<4x8x32xf32, #tpu.memory_space<vmem>>, vector<4x8x32xf32>
    %c0_2 = arith.constant 0 : index
    %c0_3 = arith.constant 0 : index
    %1 = vector.load %arg2[%c0_2, %c0_3] : memref<1x32xf32, #tpu.memory_space<vmem>>, vector<1x32xf32>
    %2 = vector.shape_cast %1 : vector<1x32xf32> to vector<1x1x32xf32>
    %3 = vector.broadcast %2 : vector<1x1x32xf32> to vector<4x8x32xf32>
    %4 = arith.mulf %0, %3 : vector<4x8x32xf32>
    %cst = arith.constant dense<0.000000e+00> : vector<4x8xf32>
    %5 = vector.multi_reduction <add>, %4, %cst [2] : vector<4x8x32xf32> to vector<4x8xf32>
    %6 = vector.shape_cast %5 : vector<4x8xf32> to vector<4x1x8xf32>
    %c0_4 = arith.constant 0 : index
    %c0_5 = arith.constant 0 : index
    %c0_6 = arith.constant 0 : index
    %7 = vector.load %arg3[%c0_4, %c0_5, %c0_6] : memref<4x1x8xf32, #tpu.memory_space<vmem>>, vector<4x1x8xf32>
    %cst_7 = arith.constant 0.000000e+00 : f32
    %8 = vector.broadcast %cst_7 : f32 to vector<4x1x8xf32>
    %9 = arith.cmpf oeq, %7, %8 : vector<4x1x8xf32>
    %cst_8 = arith.constant 0xFF800000 : f32
    %10 = vector.broadcast %cst_8 : f32 to vector<4x1x8xf32>
    %11 = arith.select %9, %10, %6 : vector<4x1x8xi1>, vector<4x1x8xf32>
    %cst_9 = arith.constant dense<0xFF800000> : vector<4x1xf32>
    %12 = vector.multi_reduction <maximumf>, %11, %cst_9 [2] : vector<4x1x8xf32> to vector<4x1xf32>
    %13 = vector.shape_cast %12 : vector<4x1xf32> to vector<4x1x1xf32>
    %14 = vector.broadcast %13 : vector<4x1x1xf32> to vector<4x1x8xf32>
    %15 = arith.subf %11, %14 : vector<4x1x8xf32>
    %16 = math.exp %15 : vector<4x1x8xf32>
    %cst_10 = arith.constant dense<0.000000e+00> : vector<4x1xf32>
    %17 = vector.multi_reduction <add>, %16, %cst_10 [2] : vector<4x1x8xf32> to vector<4x1xf32>
    %18 = vector.shape_cast %17 : vector<4x1xf32> to vector<4x1x1xf32>
    %19 = vector.broadcast %18 : vector<4x1x1xf32> to vector<4x1x8xf32>
    %20 = arith.divf %16, %19 : vector<4x1x8xf32>
    "tpu.trace_start"() <{level = 10 : i32, message = "bqs,bsd->bqd"}> : () -> ()
    %cst_11 = arith.constant dense<0.000000e+00> : vector<4x1x32xf32>
    %21 = tpu.matmul %20, %0, %cst_11 {dimension_numbers = #tpu.dot_dimension_numbers<[2], [1], [1], [2], [0, 0, 0, 1, 1, 2], [0], [0]>} : vector<4x1x8xf32>, vector<4x8x32xf32>, vector<4x1x32xf32> -> vector<4x1x32xf32>
    "tpu.trace_stop"() : () -> ()
    %c0_12 = arith.constant 0 : index
    %c0_13 = arith.constant 0 : index
    %c0_14 = arith.constant 0 : index
    %22 = vector.load %arg4[%c0_12, %c0_13, %c0_14] : memref<4x1x32xf32, #tpu.memory_space<vmem>>, vector<4x1x32xf32>
    tpu.vector_store %arg4[%c0_12, %c0_13, %c0_14], %21 {strides = array<i32>} : memref<4x1x32xf32, #tpu.memory_space<vmem>>, vector<4x1x32xf32>,
    %c0_15 = arith.constant 0 : index
    %c0_16 = arith.constant 0 : index
    %c0_17 = arith.constant 0 : index
    %23 = vector.load %arg5[%c0_15, %c0_16, %c0_17] : memref<4x1x8xf32, #tpu.memory_space<vmem>>, vector<4x1x8xf32>
    tpu.vector_store %arg5[%c0_15, %c0_16, %c0_17], %20 {strides = array<i32>} : memref<4x1x8xf32, #tpu.memory_space<vmem>>, vector<4x1x8xf32>,
    return
  }
  func.func @transform_0(%arg0: i32) -> (i32, i32, i32) {
    %c0_i32 = arith.constant 0 : i32
    %c0_i32_0 = arith.constant 0 : i32
    %c0_i32_1 = arith.constant 0 : i32
    return %arg0, %c0_i32, %c0_i32_0 : i32, i32, i32
  }
  func.func @transform_1(%arg0: i32) -> (i32, i32) {
    %c0_i32 = arith.constant 0 : i32
    %c0_i32_0 = arith.constant 0 : i32
    %c0_i32_1 = arith.constant 0 : i32
    return %c0_i32, %c0_i32_0 : i32, i32
  }
  func.func @transform_2(%arg0: i32) -> (i32, i32, i32) {
    %c0_i32 = arith.constant 0 : i32
    %c0_i32_0 = arith.constant 0 : i32
    %c0_i32_1 = arith.constant 0 : i32
    return %arg0, %c0_i32, %c0_i32_0 : i32, i32, i32
  }
  func.func @transform_3(%arg0: i32) -> (i32, i32, i32) {
    %c0_i32 = arith.constant 0 : i32
    %c0_i32_0 = arith.constant 0 : i32
    %c0_i32_1 = arith.constant 0 : i32
    return %arg0, %c0_i32, %c0_i32_0 : i32, i32, i32
  }
  func.func @transform_4(%arg0: i32) -> (i32, i32, i32) {
    %c0_i32 = arith.constant 0 : i32
    %c0_i32_0 = arith.constant 0 : i32
    %c0_i32_1 = arith.constant 0 : i32
    return %arg0, %c0_i32, %c0_i32_0 : i32, i32, i32
  }
}

</mosaic_0001>

<llo_original>
// kernel: tpu_custom_call.1
$region0: #{tpu_custom_call.1}
  #allocation0 [shape = 'u32[]', space=smem, size = 0x4, offset = 0x4, fixed_abs, tag = 'smem constant byte address 0x4 - core index']
  #allocation1 [shape = 'u32[144,128]{1,0:T(1,128)}', space=vmem, size = 0x12000, scoped, tag = 'internal scratch']
  %s0 = inlined_call_operand.hbm [shape: f32[4,8,32], index: 0, kind: input, shape index: {}]
  %s1 = inlined_call_operand.vmem [shape: f32[1,32], index: 1, kind: input, shape index: {}]
  %s2 = inlined_call_operand.vmem [shape: f32[4,1,8], index: 2, kind: input, shape index: {}]
  %s3 = inlined_call_operand.hbm [shape: f32[4,1,32], index: 3, kind: output, shape index: {0}]
  %s4 = inlined_call_operand.hbm [shape: f32[4,1,8], index: 4, kind: output, shape index: {1}]
  %5 = xla_tuple %s3, %s4
  %s6 = sld [smem:[#allocation0]]
  $region34: #{tpu_custom_call.1} parent=0
    _
  %s8 = ssub.s32 1, %s6
  %s9 = scalar_select 0, %s8, %s6
  $region1: #{tpu_custom_call.1} parent=0
    #allocation2 [shape = 'u8[16384]{0}', space=vmem, size = 0x4000, scoped, tag = 'input window, operand 0, single buffered']
    #allocation3 [shape = 's32[1]{0}', space=sflag, size = 0x4, scoped, tag = 'scoped memory for tpu_custom_call.1']
    #allocation4 [shape = 's32[1]{0}', space=sflag, size = 0x4, scoped, tag = 'scoped memory for tpu_custom_call.1']
    #allocation5 [shape = 'u8[2048]{0}', space=vmem, size = 0x800, scoped, tag = 'output window, operand 0, single buffered']
    #allocation6 [shape = 'u8[2048]{0}', space=vmem, size = 0x800, scoped, tag = 'output window, operand 1, single buffered']
    #allocation7 [shape = 's32[1]{0}', space=sflag, size = 0x4, scoped, tag = 'scoped memory for tpu_custom_call.1']
    %10 = vsyncpa [#allocation3], 0
    %11 = vsyncpa [#allocation4], 0
    %12 = vsyncpa [#allocation7], 0
    // Predicated region
    $region2: #{tpu_custom_call.1} parent=1 // pred_check
      _
    $region3: #{tpu_custom_call.1} parent=1 // pred_check_branch
      %14 = sbr.rel (0) target = $region5
    $region4: #{tpu_custom_call.1} parent=1 // pred_region
      %s16 = ssub.s32 512, 512
      %17 = vsyncadd [#allocation3], %s16
      %s18 = sshll.u32 [#allocation2], 4
      %s19 = int_to_ptr.vmem [resolvable:$true] %s18
      %24 = dma.hbm_to_vmem [thread:$0]  %s0, 512, %s19, [#allocation3], 128, 128, 8
    $region5: #{tpu_custom_call.1} parent=1 // pred_fallthru
      _
    // Predicated region
    $region6: #{tpu_custom_call.1} parent=1 // pred_check
      _
    $region7: #{tpu_custom_call.1} parent=1 // pred_check_branch
      %26 = sbr.rel (0) target = $region9
    $region8: #{tpu_custom_call.1} parent=1 // pred_region
      _
    $region9: #{tpu_custom_call.1} parent=1 // pred_fallthru
      _
    // Predicated region
    $region10: #{tpu_custom_call.1} parent=1 // pred_check
      _
    $region11: #{tpu_custom_call.1} parent=1 // pred_check_branch
      %28 = sbr.rel (0) target = $region13
    $region12: #{tpu_custom_call.1} parent=1 // pred_region
      _
    $region13: #{tpu_custom_call.1} parent=1 // pred_fallthru
      _
    // Predicated region
    $region14: #{tpu_custom_call.1} parent=1 // pred_check
      _
    $region15: #{tpu_custom_call.1} parent=1 // pred_check_branch
      %30 = sbr.rel (0) target = $region17
    $region16: #{tpu_custom_call.1} parent=1 // pred_region
      %31 = dma.done [#allocation3], 512
    $region17: #{tpu_custom_call.1} parent=1 // pred_fallthru
      _
    %v32 = vld [vmem:[#allocation2] sm:$0xff]
    %v33 = vld [vmem:[#allocation2 + $0x8] sm:$0xff]
    %v34 = vld [vmem:[#allocation2 + $0x10] sm:$0xff]
    %v35 = vld [vmem:[#allocation2 + $0x18] sm:$0xff]
    %v36 = vld [vmem:[%s1] sm:$0x1]
    %v38 = vlaneseq
    %v39 = vshrl.u32 %v38, 7
    %v40 = vsub.s32 0, %v39
    %v41 = vrot.slane %v36, %v40
    %v43 = vmul.f32 %v32, %v41
    %v44 = vmul.f32 %v33, %v41
    %v45 = vmul.f32 %v34, %v41
    %v46 = vmul.f32 %v35, %v41
    %vm47 = vcmask 261120
    %v48 = vsel %vm47, %v43, 0.0
    %49 = vadd.xlane.f32.xlu0 %v48
    %v50 = vpop.xlane.xlu0 %49
    %v51 = vsel %vm47, %v44, 0.0
    %52 = vadd.xlane.f32.xlu0 %v51
    %v53 = vpop.xlane.xlu0 %52
    %v54 = vsel %vm47, %v45, 0.0
    %55 = vadd.xlane.f32.xlu0 %v54
    %v56 = vpop.xlane.xlu0 %55
    %v57 = vsel %vm47, %v46, 0.0
    %58 = vadd.xlane.f32.xlu0 %v57
    %v59 = vpop.xlane.xlu0 %58
    %v60 = vld [vmem:[%s2] sm:$0x1]
    %v61 = vld [vmem:[%s2 + $0x1] sm:$0x1]
    %v62 = vld [vmem:[%s2 + $0x2] sm:$0x1]
    %v63 = vld [vmem:[%s2 + $0x3] sm:$0x1]
    %vm64 = vcmp.eq.f32.partialorder %v60, 0.0
    %vm65 = vcmp.eq.f32.partialorder %v61, 0.0
    %vm66 = vcmp.eq.f32.partialorder %v62, 0.0
    %vm67 = vcmp.eq.f32.partialorder %v63, 0.0
    %v72 = vlaneseq
    %v73 = vshrl.u32 %v72, 7
    %v74 = vsub.s32 0, %v73
    %v75 = vrot.slane %v50, %v74
    %v76 = vlaneseq
    %v77 = vshrl.u32 %v76, 7
    %v78 = vsub.s32 1, %v77
    %v79 = vrot.slane %v50, %v78
    %v80 = vlaneseq
    %v81 = vshrl.u32 %v80, 7
    %v82 = vsub.s32 2, %v81
    %v83 = vrot.slane %v50, %v82
    %v84 = vlaneseq
    %v85 = vshrl.u32 %v84, 7
    %v86 = vsub.s32 3, %v85
    %v87 = vrot.slane %v50, %v86
    %v88 = vlaneseq
    %v89 = vshrl.u32 %v88, 7
    %v90 = vsub.s32 4, %v89
    %v91 = vrot.slane %v50, %v90
    %v92 = vlaneseq
    %v93 = vshrl.u32 %v92, 7
    %v94 = vsub.s32 5, %v93
    %v95 = vrot.slane %v50, %v94
    %v96 = vlaneseq
    %v97 = vshrl.u32 %v96, 7
    %v98 = vsub.s32 6, %v97
    %v99 = vrot.slane %v50, %v98
    %v100 = vlaneseq
    %v101 = vshrl.u32 %v100, 7
    %v102 = vsub.s32 7, %v101
    %v103 = vrot.slane %v50, %v102
    %v104 = vlaneseq
    %v105 = vshrl.u32 %v104, 7
    %v106 = vsub.s32 0, %v105
    %v107 = vrot.slane %v53, %v106
    %v108 = vlaneseq
    %v109 = vshrl.u32 %v108, 7
    %v110 = vsub.s32 1, %v109
    %v111 = vrot.slane %v53, %v110
    %v112 = vlaneseq
    %v113 = vshrl.u32 %v112, 7
    %v114 = vsub.s32 2, %v113
    %v115 = vrot.slane %v53, %v114
    %v116 = vlaneseq
    %v117 = vshrl.u32 %v116, 7
    %v118 = vsub.s32 3, %v117
    %v119 = vrot.slane %v53, %v118
    %v120 = vlaneseq
    %v121 = vshrl.u32 %v120, 7
    %v122 = vsub.s32 4, %v121
    %v123 = vrot.slane %v53, %v122
    %v124 = vlaneseq
    %v125 = vshrl.u32 %v124, 7
    %v126 = vsub.s32 5, %v125
    %v127 = vrot.slane %v53, %v126
    %v128 = vlaneseq
    %v129 = vshrl.u32 %v128, 7
    %v130 = vsub.s32 6, %v129
    %v131 = vrot.slane %v53, %v130
    %v132 = vlaneseq
    %v133 = vshrl.u32 %v132, 7
    %v134 = vsub.s32 7, %v133
    %v135 = vrot.slane %v53, %v134
    %v136 = vlaneseq
    %v137 = vshrl.u32 %v136, 7
    %v138 = vsub.s32 0, %v137
    %v139 = vrot.slane %v56, %v138
    %v140 = vlaneseq
    %v141 = vshrl.u32 %v140, 7
    %v142 = vsub.s32 1, %v141
    %v143 = vrot.slane %v56, %v142
    %v144 = vlaneseq
    %v145 = vshrl.u32 %v144, 7
    %v146 = vsub.s32 2, %v145
    %v147 = vrot.slane %v56, %v146
    %v148 = vlaneseq
    %v149 = vshrl.u32 %v148, 7
    %v150 = vsub.s32 3, %v149
    %v151 = vrot.slane %v56, %v150
    %v152 = vlaneseq
    %v153 = vshrl.u32 %v152, 7
    %v154 = vsub.s32 4, %v153
    %v155 = vrot.slane %v56, %v154
    %v156 = vlaneseq
    %v157 = vshrl.u32 %v156, 7
    %v158 = vsub.s32 5, %v157
    %v159 = vrot.slane %v56, %v158
    %v160 = vlaneseq
    %v161 = vshrl.u32 %v160, 7
    %v162 = vsub.s32 6, %v161
    %v163 = vrot.slane %v56, %v162
    %v164 = vlaneseq
    %v165 = vshrl.u32 %v164, 7
    %v166 = vsub.s32 7, %v165
    %v167 = vrot.slane %v56, %v166
    %v168 = vlaneseq
    %v169 = vshrl.u32 %v168, 7
    %v170 = vsub.s32 0, %v169
    %v171 = vrot.slane %v59, %v170
    %v172 = vlaneseq
    %v173 = vshrl.u32 %v172, 7
    %v174 = vsub.s32 1, %v173
    %v175 = vrot.slane %v59, %v174
    %v176 = vlaneseq
    %v177 = vshrl.u32 %v176, 7
    %v178 = vsub.s32 2, %v177
    %v179 = vrot.slane %v59, %v178
    %v180 = vlaneseq
    %v181 = vshrl.u32 %v180, 7
    %v182 = vsub.s32 3, %v181
    %v183 = vrot.slane %v59, %v182
    %v184 = vlaneseq
    %v185 = vshrl.u32 %v184, 7
    %v186 = vsub.s32 4, %v185
    %v187 = vrot.slane %v59, %v186
    %v188 = vlaneseq
    %v189 = vshrl.u32 %v188, 7
    %v190 = vsub.s32 5, %v189
    %v191 = vrot.slane %v59, %v190
    %v192 = vlaneseq
    %v193 = vshrl.u32 %v192, 7
    %v194 = vsub.s32 6, %v193
    %v195 = vrot.slane %v59, %v194
    %v196 = vlaneseq
    %v197 = vshrl.u32 %v196, 7
    %v198 = vsub.s32 7, %v197
    %v199 = vrot.slane %v59, %v198
    %v200 = vcombine.low %v75, %v79
    %v201 = vcombine.low %v83, %v87
    %v202 = vcombine.low %v91, %v95
    %v203 = vcombine.low %v99, %v103
    %v205 = vunpack.c.l.s4 1966171168
    %v206 = vunpack.c.0.s8 %v205
    %v207 = vlaneseq
    %v208 = vshrl.u32 %v207, 7
    %v209 = vsub.s32 %v206, %v208
    %v210 = vrot.slane %v200, %v209
    %v212 = vunpack.c.l.s4 1966171168
    %v213 = vunpack.c.0.s8 %v212
    %v214 = vlaneseq
    %v215 = vshrl.u32 %v214, 7
    %v216 = vsub.s32 %v213, %v215
    %v217 = vrot.slane %v201, %v216
    %v219 = vunpack.c.l.s4 1966171168
    %v220 = vunpack.c.0.s8 %v219
    %v221 = vlaneseq
    %v222 = vshrl.u32 %v221, 7
    %v223 = vsub.s32 %v220, %v222
    %v224 = vrot.slane %v202, %v223
    %v226 = vunpack.c.l.s4 1966171168
    %v227 = vunpack.c.0.s8 %v226
    %v228 = vlaneseq
    %v229 = vshrl.u32 %v228, 7
    %v230 = vsub.s32 %v227, %v229
    %v231 = vrot.slane %v203, %v230
    %v232 = vcombine.low %v210, %v217
    %v233 = vcombine.low %v224, %v231
    %v235 = vunpack.c.l.s4 1966171168
    %v236 = vunpack.c.0.s8 %v235
    %v237 = vlaneseq
    %v238 = vshrl.u32 %v237, 7
    %v239 = vsub.s32 %v236, %v238
    %v240 = vrot.slane %v232, %v239
    %v242 = vunpack.c.l.s4 1966171168
    %v243 = vunpack.c.0.s8 %v242
    %v244 = vlaneseq
    %v245 = vshrl.u32 %v244, 7
    %v246 = vsub.s32 %v243, %v245
    %v247 = vrot.slane %v233, %v246
    %v248 = vcombine.low %v240, %v247
    %v249 = vcombine.low %v107, %v111
    %v250 = vcombine.low %v115, %v119
    %v251 = vcombine.low %v123, %v127
    %v252 = vcombine.low %v131, %v135
    %v254 = vunpack.c.l.s4 1966171168
    %v255 = vunpack.c.0.s8 %v254
    %v256 = vlaneseq
    %v257 = vshrl.u32 %v256, 7
    %v258 = vsub.s32 %v255, %v257
    %v259 = vrot.slane %v249, %v258
    %v261 = vunpack.c.l.s4 1966171168
    %v262 = vunpack.c.0.s8 %v261
    %v263 = vlaneseq
    %v264 = vshrl.u32 %v263, 7
    %v265 = vsub.s32 %v262, %v264
    %v266 = vrot.slane %v250, %v265
    %v268 = vunpack.c.l.s4 1966171168
    %v269 = vunpack.c.0.s8 %v268
    %v270 = vlaneseq
    %v271 = vshrl.u32 %v270, 7
    %v272 = vsub.s32 %v269, %v271
    %v273 = vrot.slane %v251, %v272
    %v275 = vunpack.c.l.s4 1966171168
    %v276 = vunpack.c.0.s8 %v275
    %v277 = vlaneseq
    %v278 = vshrl.u32 %v277, 7
    %v279 = vsub.s32 %v276, %v278
    %v280 = vrot.slane %v252, %v279
    %v281 = vcombine.low %v259, %v266
    %v282 = vcombine.low %v273, %v280
    %v284 = vunpack.c.l.s4 1966171168
    %v285 = vunpack.c.0.s8 %v284
    %v286 = vlaneseq
    %v287 = vshrl.u32 %v286, 7
    %v288 = vsub.s32 %v285, %v287
    %v289 = vrot.slane %v281, %v288
    %v291 = vunpack.c.l.s4 1966171168
    %v292 = vunpack.c.0.s8 %v291
    %v293 = vlaneseq
    %v294 = vshrl.u32 %v293, 7
    %v295 = vsub.s32 %v292, %v294
    %v296 = vrot.slane %v282, %v295
    %v297 = vcombine.low %v289, %v296
    %v298 = vcombine.low %v139, %v143
    %v299 = vcombine.low %v147, %v151
    %v300 = vcombine.low %v155, %v159
    %v301 = vcombine.low %v163, %v167
    %v303 = vunpack.c.l.s4 1966171168
    %v304 = vunpack.c.0.s8 %v303
    %v305 = vlaneseq
    %v306 = vshrl.u32 %v305, 7
    %v307 = vsub.s32 %v304, %v306
    %v308 = vrot.slane %v298, %v307
    %v310 = vunpack.c.l.s4 1966171168
    %v311 = vunpack.c.0.s8 %v310
    %v312 = vlaneseq
    %v313 = vshrl.u32 %v312, 7
    %v314 = vsub.s32 %v311, %v313
    %v315 = vrot.slane %v299, %v314
    %v317 = vunpack.c.l.s4 1966171168
    %v318 = vunpack.c.0.s8 %v317
    %v319 = vlaneseq
    %v320 = vshrl.u32 %v319, 7
    %v321 = vsub.s32 %v318, %v320
    %v322 = vrot.slane %v300, %v321
    %v324 = vunpack.c.l.s4 1966171168
    %v325 = vunpack.c.0.s8 %v324
    %v326 = vlaneseq
    %v327 = vshrl.u32 %v326, 7
    %v328 = vsub.s32 %v325, %v327
    %v329 = vrot.slane %v301, %v328
    %v330 = vcombine.low %v308, %v315
    %v331 = vcombine.low %v322, %v329
    %v333 = vunpack.c.l.s4 1966171168
    %v334 = vunpack.c.0.s8 %v333
    %v335 = vlaneseq
    %v336 = vshrl.u32 %v335, 7
    %v337 = vsub.s32 %v334, %v336
    %v338 = vrot.slane %v330, %v337
    %v340 = vunpack.c.l.s4 1966171168
    %v341 = vunpack.c.0.s8 %v340
    %v342 = vlaneseq
    %v343 = vshrl.u32 %v342, 7
    %v344 = vsub.s32 %v341, %v343
    %v345 = vrot.slane %v331, %v344
    %v346 = vcombine.low %v338, %v345
    %v347 = vcombine.low %v171, %v175
    %v348 = vcombine.low %v179, %v183
    %v349 = vcombine.low %v187, %v191
    %v350 = vcombine.low %v195, %v199
    %v352 = vunpack.c.l.s4 1966171168
    %v353 = vunpack.c.0.s8 %v352
    %v354 = vlaneseq
    %v355 = vshrl.u32 %v354, 7
    %v356 = vsub.s32 %v353, %v355
    %v357 = vrot.slane %v347, %v356
    %v359 = vunpack.c.l.s4 1966171168
    %v360 = vunpack.c.0.s8 %v359
    %v361 = vlaneseq
    %v362 = vshrl.u32 %v361, 7
    %v363 = vsub.s32 %v360, %v362
    %v364 = vrot.slane %v348, %v363
    %v366 = vunpack.c.l.s4 1966171168
    %v367 = vunpack.c.0.s8 %v366
    %v368 = vlaneseq
    %v369 = vshrl.u32 %v368, 7
    %v370 = vsub.s32 %v367, %v369
    %v371 = vrot.slane %v349, %v370
    %v373 = vunpack.c.l.s4 1966171168
    %v374 = vunpack.c.0.s8 %v373
    %v375 = vlaneseq
    %v376 = vshrl.u32 %v375, 7
    %v377 = vsub.s32 %v374, %v376
    %v378 = vrot.slane %v350, %v377
    %v379 = vcombine.low %v357, %v364
    %v380 = vcombine.low %v371, %v378
    %v382 = vunpack.c.l.s4 1966171168
    %v383 = vunpack.c.0.s8 %v382
    %v384 = vlaneseq
    %v385 = vshrl.u32 %v384, 7
    %v386 = vsub.s32 %v383, %v385
    %v387 = vrot.slane %v379, %v386
    %v389 = vunpack.c.l.s4 1966171168
    %v390 = vunpack.c.0.s8 %v389
    %v391 = vlaneseq
    %v392 = vshrl.u32 %v391, 7
    %v393 = vsub.s32 %v390, %v392
    %v394 = vrot.slane %v380, %v393
    %v395 = vcombine.low %v387, %v394
    %396 = vset.pattern.permute.xlu0 0
    %397 = vperm.xlu0 %396, %v248
    %v398 = vpop.permute.xlu0 %397
    %399 = vset.pattern.permute.xlu0 0
    %400 = vperm.xlu0 %399, %v297
    %v401 = vpop.permute.xlu0 %400
    %402 = vset.pattern.permute.xlu0 0
    %403 = vperm.xlu0 %402, %v346
    %v404 = vpop.permute.xlu0 %403
    %405 = vset.pattern.permute.xlu0 0
    %406 = vperm.xlu0 %405, %v395
    %v407 = vpop.permute.xlu0 %406
    %v408 = vlaneseq
    %v409 = vand.u32 %v408, 127
    %v410 = vlaneseq
    %v411 = vshrl.u32 %v410, 7
    %v412 = vsub.s32 %v409, %v411
    %v413 = vrot.slane %v398, %v412
    %v414 = vlaneseq
    %v415 = vshrl.u32 %v414, 7
    %v416 = vsub.s32 %v409, %v415
    %v417 = vrot.slane %v401, %v416
    %v418 = vlaneseq
    %v419 = vshrl.u32 %v418, 7
    %v420 = vsub.s32 %v409, %v419
    %v421 = vrot.slane %v404, %v420
    %v422 = vlaneseq
    %v423 = vshrl.u32 %v422, 7
    %v424 = vsub.s32 %v409, %v423
    %v425 = vrot.slane %v407, %v424
    %v427 = vunpack.c.l.s4 1966171168
    %v428 = vunpack.c.0.s8 %v427
    %v429 = vlaneseq
    %v430 = vshrl.u32 %v429, 7
    %v431 = vsub.s32 %v428, %v430
    %v432 = vrot.slane %v413, %v431
    %v434 = vunpack.c.l.s4 1966171168
    %v435 = vunpack.c.0.s8 %v434
    %v436 = vlaneseq
    %v437 = vshrl.u32 %v436, 7
    %v438 = vsub.s32 %v435, %v437
    %v439 = vrot.slane %v432, %v438
    %v441 = vunpack.c.l.s4 1966171168
    %v442 = vunpack.c.0.s8 %v441
    %v443 = vlaneseq
    %v444 = vshrl.u32 %v443, 7
    %v445 = vsub.s32 %v442, %v444
    %v446 = vrot.slane %v417, %v445
    %v448 = vunpack.c.l.s4 1966171168
    %v449 = vunpack.c.0.s8 %v448
    %v450 = vlaneseq
    %v451 = vshrl.u32 %v450, 7
    %v452 = vsub.s32 %v449, %v451
    %v453 = vrot.slane %v446, %v452
    %v455 = vunpack.c.l.s4 1966171168
    %v456 = vunpack.c.0.s8 %v455
    %v457 = vlaneseq
    %v458 = vshrl.u32 %v457, 7
    %v459 = vsub.s32 %v456, %v458
    %v460 = vrot.slane %v421, %v459
    %v462 = vunpack.c.l.s4 1966171168
    %v463 = vunpack.c.0.s8 %v462
    %v464 = vlaneseq
    %v465 = vshrl.u32 %v464, 7
    %v466 = vsub.s32 %v463, %v465
    %v467 = vrot.slane %v460, %v466
    %v469 = vunpack.c.l.s4 1966171168
    %v470 = vunpack.c.0.s8 %v469
    %v471 = vlaneseq
    %v472 = vshrl.u32 %v471, 7
    %v473 = vsub.s32 %v470, %v472
    %v474 = vrot.slane %v425, %v473
    %v476 = vunpack.c.l.s4 1966171168
    %v477 = vunpack.c.0.s8 %v476
    %v478 = vlaneseq
    %v479 = vshrl.u32 %v478, 7
    %v480 = vsub.s32 %v477, %v479
    %v481 = vrot.slane %v474, %v480
    %v486 = vsel %vm64, -inf, %v439
    %v487 = vsel %vm65, -inf, %v453
    %v488 = vsel %vm66, -inf, %v467
    %v489 = vsel %vm67, -inf, %v481
    %vm490 = vcmask 57344
    %v491 = vsel %vm490, %v486, -inf
    %492 = vmax.xlane.f32.xlu0 %v491
    %v493 = vpop.xlane.xlu0 %492
    %v494 = vsel %vm490, %v487, -inf
    %495 = vmax.xlane.f32.xlu0 %v494
    %v496 = vpop.xlane.xlu0 %495
    %v497 = vsel %vm490, %v488, -inf
    %498 = vmax.xlane.f32.xlu0 %v497
    %v499 = vpop.xlane.xlu0 %498
    %v500 = vsel %vm490, %v489, -inf
    %501 = vmax.xlane.f32.xlu0 %v500
    %v502 = vpop.xlane.xlu0 %501
    %v503 = vsub.f32 %v486, %v493
    %v504 = vsub.f32 %v487, %v496
    %v505 = vsub.f32 %v488, %v499
    %v506 = vsub.f32 %v489, %v502
    %v507 = vmul.f32 %v503, 1.442695
    %v508 = vpow.pop %v507
    %v509 = vmul.f32 %v504, 1.442695
    %v510 = vpow.pop %v509
    %v511 = vmul.f32 %v505, 1.442695
    %v512 = vpow.pop %v511
    %v513 = vmul.f32 %v506, 1.442695
    %v514 = vpow.pop %v513
    %v515 = vsel %vm490, %v508, 0.0
    %516 = vadd.xlane.f32.xlu0 %v515
    %v517 = vpop.xlane.xlu0 %516
    %v518 = vsel %vm490, %v510, 0.0
    %519 = vadd.xlane.f32.xlu0 %v518
    %v520 = vpop.xlane.xlu0 %519
    %v521 = vsel %vm490, %v512, 0.0
    %522 = vadd.xlane.f32.xlu0 %v521
    %v523 = vpop.xlane.xlu0 %522
    %v524 = vsel %vm490, %v514, 0.0
    %525 = vadd.xlane.f32.xlu0 %v524
    %v526 = vpop.xlane.xlu0 %525
    %v527 = vrcp.pop %v517
    %v528 = vmul.f32 %v508, %v527
    %v529 = vrcp.pop %v520
    %v530 = vmul.f32 %v510, %v529
    %v531 = vrcp.pop %v523
    %v532 = vmul.f32 %v512, %v531
    %v533 = vrcp.pop %v526
    %v534 = vmul.f32 %v514, %v533
    %vm535 = vcmask 64512
    %v537 = vsel %vm535, %v528, 0
    %539 = vmatprep.subr.mxu0 0.0
    %540 = vmatpush1.msra.mxu0 %v32
    %541 = vmatprep.subr.mxu0 0.0
    %542 = vmatpush1.msra.mxu0 0.0
    %543 = vmatprep.subr.mxu0 0.0
    %544 = vmatpush1.msra.mxu0 0.0
    %545 = vmatprep.subr.mxu0 0.0
    %546 = vmatpush1.msra.mxu0 0.0
    %547 = vmatprep.subr.mxu0 0.0
    %548 = vmatpush1.msra.mxu0 0.0
    %549 = vmatprep.subr.mxu0 0.0
    %550 = vmatpush1.msra.mxu0 0.0
    %551 = vmatprep.subr.mxu0 0.0
    %552 = vmatpush1.msra.mxu0 0.0
    %553 = vmatprep.subr.mxu0 0.0
    %554 = vmatpush1.msra.mxu0 0.0
    %555 = vmatprep.subr.mxu0 0.0
    %556 = vmatpush1.msra.mxu0 0.0
    %557 = vmatprep.subr.mxu0 0.0
    %558 = vmatpush1.msra.mxu0 0.0
    %559 = vmatprep.subr.mxu0 0.0
    %560 = vmatpush1.msra.mxu0 0.0
    %561 = vmatprep.subr.mxu0 0.0
    %562 = vmatpush1.msra.mxu0 0.0
    %563 = vmatprep.subr.mxu0 0.0
    %564 = vmatpush1.msra.mxu0 0.0
    %565 = vmatprep.subr.mxu0 0.0
    %566 = vmatpush1.msra.mxu0 0.0
    %567 = vmatprep.subr.mxu0 0.0
    %568 = vmatpush1.msra.mxu0 0.0
    %569 = vmatprep.subr.mxu0 0.0
    %570 = vmatpush1.msra.mxu0 0.0
    %571 = vmatprep.subr.mxu0 0.0
    %572 = vmatpush1.msra.mxu0 0.0
    %573 = vmatprep.subr.mxu0 0.0
    %574 = vmatpush1.msra.mxu0 0.0
    %575 = vmatprep.subr.mxu0 0.0
    %576 = vmatpush1.msra.mxu0 0.0
    %577 = vmatprep.subr.mxu0 0.0
    %578 = vmatpush1.msra.mxu0 0.0
    %579 = vmatprep.subr.mxu0 0.0
    %580 = vmatpush1.msra.mxu0 0.0
    %581 = vmatprep.subr.mxu0 0.0
    %582 = vmatpush1.msra.mxu0 0.0
    %583 = vmatprep.subr.mxu0 0.0
    %584 = vmatpush1.msra.mxu0 0.0
    %585 = vmatprep.subr.mxu0 0.0
    %586 = vmatpush1.msra.mxu0 0.0
    %587 = vmatprep.subr.mxu0 0.0
    %588 = vmatpush1.msra.mxu0 0.0
    %589 = vmatprep.subr.mxu0 0.0
    %590 = vmatpush1.msra.mxu0 0.0
    %591 = vmatprep.subr.mxu0 0.0
    %592 = vmatpush1.msra.mxu0 0.0
    %593 = vmatprep.subr.mxu0 0.0
    %594 = vmatpush1.msra.mxu0 0.0
    %595 = vmatprep.subr.mxu0 0.0
    %596 = vmatpush1.msra.mxu0 0.0
    %597 = vmatprep.subr.mxu0 0.0
    %598 = vmatpush1.msra.mxu0 0.0
    %599 = vmatprep.subr.mxu0 0.0
    %600 = vmatpush1.msra.mxu0 0.0
    %601 = vmatprep.subr.mxu0 0.0
    %602 = vmatpush1.msra.mxu0 0.0
    %603 = vmatprep.mubr.f32.mxu0 0.0
    %604 = vmatmul.mubr.f32.gmra.mrb[0].mxu0 %v537
    %v605 = vpop.f32.mrb[0].mxu0
    %v606 = vadd.f32 0.0, %v605
    %v607 = vpop.f32.mrb[0].mxu0
    %608 = vdwg.mxu0
    %v610 = vsel %vm535, %v530, 0
    %612 = vmatprep.subr.mxu0 0.0
    %613 = vmatpush1.msra.mxu0 %v33
    %614 = vmatprep.subr.mxu0 0.0
    %615 = vmatpush1.msra.mxu0 0.0
    %616 = vmatprep.subr.mxu0 0.0
    %617 = vmatpush1.msra.mxu0 0.0
    %618 = vmatprep.subr.mxu0 0.0
    %619 = vmatpush1.msra.mxu0 0.0
    %620 = vmatprep.subr.mxu0 0.0
    %621 = vmatpush1.msra.mxu0 0.0
    %622 = vmatprep.subr.mxu0 0.0
    %623 = vmatpush1.msra.mxu0 0.0
    %624 = vmatprep.subr.mxu0 0.0
    %625 = vmatpush1.msra.mxu0 0.0
    %626 = vmatprep.subr.mxu0 0.0
    %627 = vmatpush1.msra.mxu0 0.0
    %628 = vmatprep.subr.mxu0 0.0
    %629 = vmatpush1.msra.mxu0 0.0
    %630 = vmatprep.subr.mxu0 0.0
    %631 = vmatpush1.msra.mxu0 0.0
    %632 = vmatprep.subr.mxu0 0.0
    %633 = vmatpush1.msra.mxu0 0.0
    %634 = vmatprep.subr.mxu0 0.0
    %635 = vmatpush1.msra.mxu0 0.0
    %636 = vmatprep.subr.mxu0 0.0
    %637 = vmatpush1.msra.mxu0 0.0
    %638 = vmatprep.subr.mxu0 0.0
    %639 = vmatpush1.msra.mxu0 0.0
    %640 = vmatprep.subr.mxu0 0.0
    %641 = vmatpush1.msra.mxu0 0.0
    %642 = vmatprep.subr.mxu0 0.0
    %643 = vmatpush1.msra.mxu0 0.0
    %644 = vmatprep.subr.mxu0 0.0
    %645 = vmatpush1.msra.mxu0 0.0
    %646 = vmatprep.subr.mxu0 0.0
    %647 = vmatpush1.msra.mxu0 0.0
    %648 = vmatprep.subr.mxu0 0.0
    %649 = vmatpush1.msra.mxu0 0.0
    %650 = vmatprep.subr.mxu0 0.0
    %651 = vmatpush1.msra.mxu0 0.0
    %652 = vmatprep.subr.mxu0 0.0
    %653 = vmatpush1.msra.mxu0 0.0
    %654 = vmatprep.subr.mxu0 0.0
    %655 = vmatpush1.msra.mxu0 0.0
    %656 = vmatprep.subr.mxu0 0.0
    %657 = vmatpush1.msra.mxu0 0.0
    %658 = vmatprep.subr.mxu0 0.0
    %659 = vmatpush1.msra.mxu0 0.0
    %660 = vmatprep.subr.mxu0 0.0
    %661 = vmatpush1.msra.mxu0 0.0
    %662 = vmatprep.subr.mxu0 0.0
    %663 = vmatpush1.msra.mxu0 0.0
    %664 = vmatprep.subr.mxu0 0.0
    %665 = vmatpush1.msra.mxu0 0.0
    %666 = vmatprep.subr.mxu0 0.0
    %667 = vmatpush1.msra.mxu0 0.0
    %668 = vmatprep.subr.mxu0 0.0
    %669 = vmatpush1.msra.mxu0 0.0
    %670 = vmatprep.subr.mxu0 0.0
    %671 = vmatpush1.msra.mxu0 0.0
    %672 = vmatprep.subr.mxu0 0.0
    %673 = vmatpush1.msra.mxu0 0.0
    %674 = vmatprep.subr.mxu0 0.0
    %675 = vmatpush1.msra.mxu0 0.0
    %676 = vmatprep.mubr.f32.mxu0 0.0
    %677 = vmatmul.mubr.f32.gmra.mrb[0].mxu0 %v610
    %v678 = vpop.f32.mrb[0].mxu0
    %v679 = vadd.f32 0.0, %v678
    %v680 = vpop.f32.mrb[0].mxu0
    %681 = vdwg.mxu0
    %v683 = vsel %vm535, %v532, 0
    %685 = vmatprep.subr.mxu0 0.0
    %686 = vmatpush1.msra.mxu0 %v34
    %687 = vmatprep.subr.mxu0 0.0
    %688 = vmatpush1.msra.mxu0 0.0
    %689 = vmatprep.subr.mxu0 0.0
    %690 = vmatpush1.msra.mxu0 0.0
    %691 = vmatprep.subr.mxu0 0.0
    %692 = vmatpush1.msra.mxu0 0.0
    %693 = vmatprep.subr.mxu0 0.0
    %694 = vmatpush1.msra.mxu0 0.0
    %695 = vmatprep.subr.mxu0 0.0
    %696 = vmatpush1.msra.mxu0 0.0
    %697 = vmatprep.subr.mxu0 0.0
    %698 = vmatpush1.msra.mxu0 0.0
    %699 = vmatprep.subr.mxu0 0.0
    %700 = vmatpush1.msra.mxu0 0.0
    %701 = vmatprep.subr.mxu0 0.0
    %702 = vmatpush1.msra.mxu0 0.0
    %703 = vmatprep.subr.mxu0 0.0
    %704 = vmatpush1.msra.mxu0 0.0
    %705 = vmatprep.subr.mxu0 0.0
    %706 = vmatpush1.msra.mxu0 0.0
    %707 = vmatprep.subr.mxu0 0.0
    %708 = vmatpush1.msra.mxu0 0.0
    %709 = vmatprep.subr.mxu0 0.0
    %710 = vmatpush1.msra.mxu0 0.0
    %711 = vmatprep.subr.mxu0 0.0
    %712 = vmatpush1.msra.mxu0 0.0
    %713 = vmatprep.subr.mxu0 0.0
    %714 = vmatpush1.msra.mxu0 0.0
    %715 = vmatprep.subr.mxu0 0.0
    %716 = vmatpush1.msra.mxu0 0.0
    %717 = vmatprep.subr.mxu0 0.0
    %718 = vmatpush1.msra.mxu0 0.0
    %719 = vmatprep.subr.mxu0 0.0
    %720 = vmatpush1.msra.mxu0 0.0
    %721 = vmatprep.subr.mxu0 0.0
    %722 = vmatpush1.msra.mxu0 0.0
    %723 = vmatprep.subr.mxu0 0.0
    %724 = vmatpush1.msra.mxu0 0.0
    %725 = vmatprep.subr.mxu0 0.0
    %726 = vmatpush1.msra.mxu0 0.0
    %727 = vmatprep.subr.mxu0 0.0
    %728 = vmatpush1.msra.mxu0 0.0
    %729 = vmatprep.subr.mxu0 0.0
    %730 = vmatpush1.msra.mxu0 0.0
    %731 = vmatprep.subr.mxu0 0.0
    %732 = vmatpush1.msra.mxu0 0.0
    %733 = vmatprep.subr.mxu0 0.0
    %734 = vmatpush1.msra.mxu0 0.0
    %735 = vmatprep.subr.mxu0 0.0
    %736 = vmatpush1.msra.mxu0 0.0
    %737 = vmatprep.subr.mxu0 0.0
    %738 = vmatpush1.msra.mxu0 0.0
    %739 = vmatprep.subr.mxu0 0.0
    %740 = vmatpush1.msra.mxu0 0.0
    %741 = vmatprep.subr.mxu0 0.0
    %742 = vmatpush1.msra.mxu0 0.0
    %743 = vmatprep.subr.mxu0 0.0
    %744 = vmatpush1.msra.mxu0 0.0
    %745 = vmatprep.subr.mxu0 0.0
    %746 = vmatpush1.msra.mxu0 0.0
    %747 = vmatprep.subr.mxu0 0.0
    %748 = vmatpush1.msra.mxu0 0.0
    %749 = vmatprep.mubr.f32.mxu0 0.0
    %750 = vmatmul.mubr.f32.gmra.mrb[0].mxu0 %v683
    %v751 = vpop.f32.mrb[0].mxu0
    %v752 = vadd.f32 0.0, %v751
    %v753 = vpop.f32.mrb[0].mxu0
    %754 = vdwg.mxu0
    %v756 = vsel %vm535, %v534, 0
    %758 = vmatprep.subr.mxu0 0.0
    %759 = vmatpush1.msra.mxu0 %v35
    %760 = vmatprep.subr.mxu0 0.0
    %761 = vmatpush1.msra.mxu0 0.0
    %762 = vmatprep.subr.mxu0 0.0
    %763 = vmatpush1.msra.mxu0 0.0
    %764 = vmatprep.subr.mxu0 0.0
    %765 = vmatpush1.msra.mxu0 0.0
    %766 = vmatprep.subr.mxu0 0.0
    %767 = vmatpush1.msra.mxu0 0.0
    %768 = vmatprep.subr.mxu0 0.0
    %769 = vmatpush1.msra.mxu0 0.0
    %770 = vmatprep.subr.mxu0 0.0
    %771 = vmatpush1.msra.mxu0 0.0
    %772 = vmatprep.subr.mxu0 0.0
    %773 = vmatpush1.msra.mxu0 0.0
    %774 = vmatprep.subr.mxu0 0.0
    %775 = vmatpush1.msra.mxu0 0.0
    %776 = vmatprep.subr.mxu0 0.0
    %777 = vmatpush1.msra.mxu0 0.0
    %778 = vmatprep.subr.mxu0 0.0
    %779 = vmatpush1.msra.mxu0 0.0
    %780 = vmatprep.subr.mxu0 0.0
    %781 = vmatpush1.msra.mxu0 0.0
    %782 = vmatprep.subr.mxu0 0.0
    %783 = vmatpush1.msra.mxu0 0.0
    %784 = vmatprep.subr.mxu0 0.0
    %785 = vmatpush1.msra.mxu0 0.0
    %786 = vmatprep.subr.mxu0 0.0
    %787 = vmatpush1.msra.mxu0 0.0
    %788 = vmatprep.subr.mxu0 0.0
    %789 = vmatpush1.msra.mxu0 0.0
    %790 = vmatprep.subr.mxu0 0.0
    %791 = vmatpush1.msra.mxu0 0.0
    %792 = vmatprep.subr.mxu0 0.0
    %793 = vmatpush1.msra.mxu0 0.0
    %794 = vmatprep.subr.mxu0 0.0
    %795 = vmatpush1.msra.mxu0 0.0
    %796 = vmatprep.subr.mxu0 0.0
    %797 = vmatpush1.msra.mxu0 0.0
    %798 = vmatprep.subr.mxu0 0.0
    %799 = vmatpush1.msra.mxu0 0.0
    %800 = vmatprep.subr.mxu0 0.0
    %801 = vmatpush1.msra.mxu0 0.0
    %802 = vmatprep.subr.mxu0 0.0
    %803 = vmatpush1.msra.mxu0 0.0
    %804 = vmatprep.subr.mxu0 0.0
    %805 = vmatpush1.msra.mxu0 0.0
    %806 = vmatprep.subr.mxu0 0.0
    %807 = vmatpush1.msra.mxu0 0.0
    %808 = vmatprep.subr.mxu0 0.0
    %809 = vmatpush1.msra.mxu0 0.0
    %810 = vmatprep.subr.mxu0 0.0
    %811 = vmatpush1.msra.mxu0 0.0
    %812 = vmatprep.subr.mxu0 0.0
    %813 = vmatpush1.msra.mxu0 0.0
    %814 = vmatprep.subr.mxu0 0.0
    %815 = vmatpush1.msra.mxu0 0.0
    %816 = vmatprep.subr.mxu0 0.0
    %817 = vmatpush1.msra.mxu0 0.0
    %818 = vmatprep.subr.mxu0 0.0
    %819 = vmatpush1.msra.mxu0 0.0
    %820 = vmatprep.subr.mxu0 0.0
    %821 = vmatpush1.msra.mxu0 0.0
    %822 = vmatprep.mubr.f32.mxu0 0.0
    %823 = vmatmul.mubr.f32.gmra.mrb[0].mxu0 %v756
    %v824 = vpop.f32.mrb[0].mxu0
    %v825 = vadd.f32 0.0, %v824
    %v826 = vpop.f32.mrb[0].mxu0
    %827 = vdwg.mxu0
    %vm828 = vcmask 253952
    %829 = vst.msk [vmem:[#allocation5] sm:$0x1] %vm828, %v606
    %830 = vst.msk [vmem:[#allocation5 + $0x1] sm:$0x1] %vm828, %v679
    %831 = vst.msk [vmem:[#allocation5 + $0x2] sm:$0x1] %vm828, %v752
    %832 = vst.msk [vmem:[#allocation5 + $0x3] sm:$0x1] %vm828, %v825
    %833 = vst.msk [vmem:[#allocation6] sm:$0x1] %vm490, %v528
    %834 = vst.msk [vmem:[#allocation6 + $0x1] sm:$0x1] %vm490, %v530
    %835 = vst.msk [vmem:[#allocation6 + $0x2] sm:$0x1] %vm490, %v532
    %836 = vst.msk [vmem:[#allocation6 + $0x3] sm:$0x1] %vm490, %v534
    // Predicated region
    $region18: #{tpu_custom_call.1} parent=1 // pred_check
      _
    $region19: #{tpu_custom_call.1} parent=1 // pred_check_branch
      %838 = sbr.rel (0) target = $region21
    $region20: #{tpu_custom_call.1} parent=1 // pred_region
      %s840 = ssub.s32 64, 64
      %841 = vsyncadd [#allocation4], %s840
      %s842 = sshll.u32 [#allocation5], 4
      %s843 = int_to_ptr.vmem [resolvable:$true] %s842
      %848 = dma.vmem_to_hbm [thread:$0]  %s843, 64, %s3, [#allocation4], 16, 16, 1
    $region21: #{tpu_custom_call.1} parent=1 // pred_fallthru
      _
    // Predicated region
    $region22: #{tpu_custom_call.1} parent=1 // pred_check
      _
    $region23: #{tpu_custom_call.1} parent=1 // pred_check_branch
      %850 = sbr.rel (0) target = $region25
    $region24: #{tpu_custom_call.1} parent=1 // pred_region
      %s852 = ssub.s32 64, 64
      %853 = vsyncadd [#allocation7], %s852
      %s854 = sshll.u32 [#allocation6], 4
      %s855 = int_to_ptr.vmem [resolvable:$true] %s854
      %860 = dma.vmem_to_hbm [thread:$0]  %s855, 64, %s4, [#allocation7], 16, 16, 1
    $region25: #{tpu_custom_call.1} parent=1 // pred_fallthru
      _
    // Predicated region
    $region26: #{tpu_custom_call.1} parent=1 // pred_check
      _
    $region27: #{tpu_custom_call.1} parent=1 // pred_check_branch
      %862 = sbr.rel (0) target = $region29
    $region28: #{tpu_custom_call.1} parent=1 // pred_region
      %863 = dma.done [#allocation4], 64
    $region29: #{tpu_custom_call.1} parent=1 // pred_fallthru
      _
    // Predicated region
    $region30: #{tpu_custom_call.1} parent=1 // pred_check
      _
    $region31: #{tpu_custom_call.1} parent=1 // pred_check_branch
      %865 = sbr.rel (0) target = $region33
    $region32: #{tpu_custom_call.1} parent=1 // pred_region
      %866 = dma.done [#allocation7], 64
    $region33: #{tpu_custom_call.1} parent=1 // pred_fallthru
      _
    %867 = vsyncpa [#allocation3], 1
    %868 = vsyncpa [#allocation4], 1
    %869 = vsyncpa [#allocation7], 1

</llo_original>
